<compile_context>
chip_gen: v5e
topology: v5e:2x2
jax: 0.10.0
libtpu: 0.0.40
codegen_flags: <defaults>
</compile_context>

<pallas_src>
import jax
import jax.numpy as jnp
from jax.experimental import pallas as pl
from jax.experimental.pallas import tpu as pltpu


# ---------------------------------------------------------------------------
# Tiling helper: largest lane-dense spatial tile that fits the VMEM budget.
# ---------------------------------------------------------------------------
def _pick_hw_tile(C, HW, budget_bytes=12 * 1024 * 1024):
    # ~4 live f32 (C, hw_tile) slabs per step in the scale pass
    # (input + output, each double-buffered).
    max_lanes = budget_bytes // (4 * C * 4)
    max_lanes = max(128, (max_lanes // 128) * 128)
    if HW <= max_lanes:
        # Full spatial extent in one tile: always a legal block dim.
        return HW
    # Lane-dense multiple of 128; remainder tile handled by masking / OOB-drop.
    return max_lanes


# ---------------------------------------------------------------------------
# Pass 1: global avg+max pooling over the flattened spatial axis.
# ---------------------------------------------------------------------------
def _make_pool_kernel(hw_total, hw_tile):
    inv_hw = 1.0 / float(hw_total)
    needs_mask = (hw_total % hw_tile) != 0

    def kernel(x_ref, y_ref, sum_sc, max_sc):
        j = pl.program_id(1)
        x = x_ref[...].astype(jnp.float32)          # (1, C, hw_tile)

        if needs_mask:
            lane = jax.lax.broadcasted_iota(jnp.int32, x.shape, 2)
            valid = (j * hw_tile + lane) < hw_total
            x_sum = jnp.where(valid, x, 0.0)
            x_max = jnp.where(valid, x, -jnp.inf)
        else:
            x_sum = x
            x_max = x

        @pl.when(j == 0)
        def _():
            sum_sc[...] = jnp.zeros_like(sum_sc)
            max_sc[...] = jnp.full_like(max_sc, -jnp.inf)

        # keepdims keeps the channel axis on sublanes (matches x's layout).
        sum_sc[...] += jnp.sum(x_sum, axis=-1, keepdims=True)
        max_sc[...] = jnp.maximum(max_sc[...],
                                  jnp.max(x_max, axis=-1, keepdims=True))

        @pl.when(j == pl.num_programs(1) - 1)
        def _():
            y_ref[...] = sum_sc[...] * inv_hw + max_sc[...]

    return kernel


# ---------------------------------------------------------------------------
# Pass 2: excitation FC stack, batched over B (single grid step).
# ---------------------------------------------------------------------------
def _excite_kernel(y_ref, w1_ref, b1_ref, a_ref, w2_ref, b2_ref, s_ref):
    y = y_ref[...]                                              # (B, C)
    h = jnp.dot(y, w1_ref[...], preferred_element_type=jnp.float32) + b1_ref[...]
    a = a_ref[0]                                                # scalar from SMEM
    h = jnp.maximum(h, 0.0) + a * jnp.minimum(h, 0.0)           # PReLU
    z = jnp.dot(h, w2_ref[...], preferred_element_type=jnp.float32) + b2_ref[...]
    s_ref[...] = jax.nn.sigmoid(z)                              # (B, C)


# ---------------------------------------------------------------------------
# Pass 3: elementwise scale x * s, lane-dense spatial tiles, in-place.
# ---------------------------------------------------------------------------
def _scale_kernel(x_ref, s_ref, o_ref):
    # x: (1, C, hw_tile), s: (1, C, 1) — sublane-aligned broadcast along lanes.
    o_ref[...] = (x_ref[...] * s_ref[...]).astype(o_ref.dtype)


# ---------------------------------------------------------------------------
# Wrapper.
# ---------------------------------------------------------------------------
@jax.jit
def se_block(x_nchw, w1, b1, prelu_a, w2, b2):
    """x_nchw: (B, C, H, W) float32. Returns (B, C, H, W)."""
    B, C, H, W = x_nchw.shape
    HW = H * W
    HID = w1.shape[1]

    hw_tile = _pick_hw_tile(C, HW)
    num_hw_tiles = pl.cdiv(HW, hw_tile)

    x_flat = x_nchw.reshape(B, C, HW)
    vmem_limit = 32 * 1024 * 1024

    # ---- Pass 1: pooled[b, c] = mean + max over spatial -------------------
    pooled = pl.pallas_call(
        _make_pool_kernel(HW, hw_tile),
        out_shape=jax.ShapeDtypeStruct((B, C, 1), jnp.float32),
        grid=(B, num_hw_tiles),
        in_specs=[pl.BlockSpec((1, C, hw_tile), lambda i, j: (i, 0, j))],
        out_specs=pl.BlockSpec((1, C, 1), lambda i, j: (i, 0, 0)),
        scratch_shapes=[pltpu.VMEM((1, C, 1), jnp.float32),
                        pltpu.VMEM((1, C, 1), jnp.float32)],
        compiler_params=pltpu.CompilerParams(
            dimension_semantics=("parallel", "arbitrary"),
            vmem_limit_bytes=vmem_limit,
        ),
    )(x_flat)

    # ---- Pass 2: batched excitation (tiny; one grid step) -----------------
    y2d = pooled.reshape(B, C)
    b1_2d = b1.reshape(1, HID)
    b2_2d = b2.reshape(1, C)
    a_1d = prelu_a.reshape(1)

    s2d = pl.pallas_call(
        _excite_kernel,
        out_shape=jax.ShapeDtypeStruct((B, C), jnp.float32),
        grid=(1,),
        in_specs=[
            pl.BlockSpec((B, C), lambda i: (0, 0)),            # pooled y
            pl.BlockSpec((C, HID), lambda i: (0, 0)),          # w1
            pl.BlockSpec((1, HID), lambda i: (0, 0)),          # b1
            pl.BlockSpec(memory_space=pltpu.MemorySpace.SMEM), # PReLU slope (scalar)
            pl.BlockSpec((HID, C), lambda i: (0, 0)),          # w2
            pl.BlockSpec((1, C), lambda i: (0, 0)),            # b2
        ],
        out_specs=pl.BlockSpec((B, C), lambda i: (0, 0)),
    )(y2d, w1, b1_2d, a_1d, w2, b2_2d)

    # ---- Pass 3: in-place elementwise scale, both axes parallel -----------
    s3d = s2d.reshape(B, C, 1)
    out_flat = pl.pallas_call(
        _scale_kernel,
        out_shape=jax.ShapeDtypeStruct((B, C, HW), x_flat.dtype),
        grid=(B, num_hw_tiles),
        in_specs=[
            pl.BlockSpec((1, C, hw_tile), lambda i, j: (i, 0, j)),
            pl.BlockSpec((1, C, 1), lambda i, j: (i, 0, 0)),
        ],
        out_specs=pl.BlockSpec((1, C, hw_tile), lambda i, j: (i, 0, j)),
        input_output_aliases={0: 0},
        compiler_params=pltpu.CompilerParams(
            dimension_semantics=("parallel", "parallel"),
            vmem_limit_bytes=vmem_limit,
        ),
    )(x_flat, s3d)

    return out_flat.reshape(B, C, H, W)


if __name__ == "__main__":
    # Small shapes consistent with the module (channel divisible by reduction=16).
    B, C, H, W = 2, 32, 16, 16
    reduction = 16
    HID = C // reduction

    key = jax.random.PRNGKey(0)
    kx, kw1, kb1, kw2, kb2 = jax.random.split(key, 5)

    x = jax.random.normal(kx, (B, C, H, W), dtype=jnp.float32)

    # Deterministic parameter init (uniform, roughly matching nn.Linear scale).
    lim1 = 1.0 / (C ** 0.5)
    w1 = jax.random.uniform(kw1, (C, HID), jnp.float32, -lim1, lim1)   # (in, out)
    b1 = jax.random.uniform(kb1, (HID,), jnp.float32, -lim1, lim1)
    lim2 = 1.0 / (HID ** 0.5)
    w2 = jax.random.uniform(kw2, (HID, C), jnp.float32, -lim2, lim2)   # (in, out)
    b2 = jax.random.uniform(kb2, (C,), jnp.float32, -lim2, lim2)
    prelu_a = jnp.full((1,), 0.25, dtype=jnp.float32)  # PyTorch PReLU default init

    out = se_block(x, w1, b1, prelu_a, w2, b2)
    jax.block_until_ready(out)

    # Lightweight sanity check against a pure-JAX reference.
    y_ref = jnp.mean(x, axis=(2, 3)) + jnp.max(x, axis=(2, 3))
    h_ref = y_ref @ w1 + b1
    h_ref = jnp.maximum(h_ref, 0.0) + prelu_a[0] * jnp.minimum(h_ref, 0.0)
    s_ref = jax.nn.sigmoid(h_ref @ w2 + b2)
    ref = x * s_ref[:, :, None, None]
    assert jnp.allclose(out, ref, atol=1e-5, rtol=1e-5)

    print("KERNEL_OK")
</pallas_src>

<mosaic_0001>
module attributes {stable_mosaic.version = 11 : i64} {
  func.func @_excite_kernel(%arg0: i32, %arg1: memref<2x32xf32, #tpu.memory_space<vmem>>, %arg2: memref<32x2xf32, #tpu.memory_space<vmem>>, %arg3: memref<1x2xf32, #tpu.memory_space<vmem>>, %arg4: memref<1xf32, #tpu.memory_space<smem>>, %arg5: memref<2x32xf32, #tpu.memory_space<vmem>>, %arg6: memref<1x32xf32, #tpu.memory_space<vmem>>, %arg7: memref<2x32xf32, #tpu.memory_space<vmem>>) attributes {dimension_semantics = [#tpu.dimension_semantics<arbitrary>], iteration_bounds = array<i64: 1>, scalar_prefetch = 0 : i64, scratch_operands = 0 : i64, tpu.core_type = #tpu.core_type<tc>, window_params = [{pipeline_mode = #tpu.pipeline_mode<synchronous>, transform_indices = @transform_0, window_bounds = array<i64: 2, 32>}, {pipeline_mode = #tpu.pipeline_mode<synchronous>, transform_indices = @transform_1, window_bounds = array<i64: 32, 2>}, {pipeline_mode = #tpu.pipeline_mode<synchronous>, transform_indices = @transform_2, window_bounds = array<i64: 1, 2>}, {transform_indices = @transform_3, window_bounds = array<i64: 1>}, {pipeline_mode = #tpu.pipeline_mode<synchronous>, transform_indices = @transform_4, window_bounds = array<i64: 2, 32>}, {pipeline_mode = #tpu.pipeline_mode<synchronous>, transform_indices = @transform_5, window_bounds = array<i64: 1, 32>}, {pipeline_mode = #tpu.pipeline_mode<synchronous>, transform_indices = @transform_6, window_bounds = array<i64: 2, 32>}]} {
    %c0 = arith.constant 0 : index
    %c0_0 = arith.constant 0 : index
    %0 = vector.load %arg1[%c0, %c0_0] : memref<2x32xf32, #tpu.memory_space<vmem>>, vector<2x32xf32>
    %c0_1 = arith.constant 0 : index
    %c0_2 = arith.constant 0 : index
    %1 = vector.load %arg2[%c0_1, %c0_2] : memref<32x2xf32, #tpu.memory_space<vmem>>, vector<32x2xf32>
    %cst = arith.constant dense<0.000000e+00> : vector<2x2xf32>
    %2 = tpu.matmul %0, %1, %cst {dimension_numbers = #tpu.dot_dimension_numbers<[1], [0], [0], [1], [0, 0, 1, 1], [], []>} : vector<2x32xf32>, vector<32x2xf32>, vector<2x2xf32> -> vector<2x2xf32>
    %c0_3 = arith.constant 0 : index
    %c0_4 = arith.constant 0 : index
    %3 = vector.load %arg3[%c0_3, %c0_4] : memref<1x2xf32, #tpu.memory_space<vmem>>, vector<1x2xf32>
    %4 = vector.broadcast %3 : vector<1x2xf32> to vector<2x2xf32>
    %5 = arith.addf %2, %4 : vector<2x2xf32>
    %c0_5 = arith.constant 0 : index
    %6 = memref.load %arg4[%c0_5] : memref<1xf32, #tpu.memory_space<smem>>
    %cst_6 = arith.constant 0.000000e+00 : f32
    %7 = vector.broadcast %cst_6 : f32 to vector<2x2xf32>
    %8 = arith.maximumf %5, %7 : vector<2x2xf32>
    %cst_7 = arith.constant 0.000000e+00 : f32
    %9 = vector.broadcast %cst_7 : f32 to vector<2x2xf32>
    %10 = arith.minimumf %5, %9 : vector<2x2xf32>
    %11 = vector.broadcast %6 : f32 to vector<2x2xf32>
    %12 = arith.mulf %11, %10 : vector<2x2xf32>
    %13 = arith.addf %8, %12 : vector<2x2xf32>
    %c0_8 = arith.constant 0 : index
    %c0_9 = arith.constant 0 : index
    %14 = vector.load %arg5[%c0_8, %c0_9] : memref<2x32xf32, #tpu.memory_space<vmem>>, vector<2x32xf32>
    %cst_10 = arith.constant dense<0.000000e+00> : vector<2x32xf32>
    %15 = tpu.matmul %13, %14, %cst_10 {dimension_numbers = #tpu.dot_dimension_numbers<[1], [0], [0], [1], [0, 0, 1, 1], [], []>} : vector<2x2xf32>, vector<2x32xf32>, vector<2x32xf32> -> vector<2x32xf32>
    %c0_11 = arith.constant 0 : index
    %c0_12 = arith.constant 0 : index
    %16 = vector.load %arg6[%c0_11, %c0_12] : memref<1x32xf32, #tpu.memory_space<vmem>>, vector<1x32xf32>
    %17 = vector.broadcast %16 : vector<1x32xf32> to vector<2x32xf32>
    %18 = arith.addf %15, %17 : vector<2x32xf32>
    %19 = arith.negf %18 : vector<2x32xf32>
    %20 = math.exp %19 : vector<2x32xf32>
    %cst_13 = arith.constant 1.000000e+00 : f32
    %21 = vector.broadcast %cst_13 : f32 to vector<2x32xf32>
    %22 = arith.addf %21, %20 : vector<2x32xf32>
    %23 = arith.divf %21, %22 : vector<2x32xf32>
    %c0_14 = arith.constant 0 : index
    %c0_15 = arith.constant 0 : index
    %24 = vector.load %arg7[%c0_14, %c0_15] : memref<2x32xf32, #tpu.memory_space<vmem>>, vector<2x32xf32>
    tpu.vector_store %arg7[%c0_14, %c0_15], %23 {strides = array<i32>} : memref<2x32xf32, #tpu.memory_space<vmem>>, vector<2x32xf32>,
    return
  }
  func.func @transform_0(%arg0: i32) -> (i32, i32) {
    %c0_i32 = arith.constant 0 : i32
    %c0_i32_0 = arith.constant 0 : i32
    %c0_i32_1 = arith.constant 0 : i32
    return %c0_i32, %c0_i32_0 : i32, i32
  }
  func.func @transform_1(%arg0: i32) -> (i32, i32) {
    %c0_i32 = arith.constant 0 : i32
    %c0_i32_0 = arith.constant 0 : i32
    %c0_i32_1 = arith.constant 0 : i32
    return %c0_i32, %c0_i32_0 : i32, i32
  }
  func.func @transform_2(%arg0: i32) -> (i32, i32) {
    %c0_i32 = arith.constant 0 : i32
    %c0_i32_0 = arith.constant 0 : i32
    %c0_i32_1 = arith.constant 0 : i32
    return %c0_i32, %c0_i32_0 : i32, i32
  }
  func.func @transform_3(%arg0: i32) -> i32 {
    %c0_i32 = arith.constant 0 : i32
    %c0_i32_0 = arith.constant 0 : i32
    return %c0_i32 : i32
  }
  func.func @transform_4(%arg0: i32) -> (i32, i32) {
    %c0_i32 = arith.constant 0 : i32
    %c0_i32_0 = arith.constant 0 : i32
    %c0_i32_1 = arith.constant 0 : i32
    return %c0_i32, %c0_i32_0 : i32, i32
  }
  func.func @transform_5(%arg0: i32) -> (i32, i32) {
    %c0_i32 = arith.constant 0 : i32
    %c0_i32_0 = arith.constant 0 : i32
    %c0_i32_1 = arith.constant 0 : i32
    return %c0_i32, %c0_i32_0 : i32, i32
  }
  func.func @transform_6(%arg0: i32) -> (i32, i32) {
    %c0_i32 = arith.constant 0 : i32
    %c0_i32_0 = arith.constant 0 : i32
    %c0_i32_1 = arith.constant 0 : i32
    return %c0_i32, %c0_i32_0 : i32, i32
  }
}

module attributes {stable_mosaic.version = 11 : i64} {
  func.func @kernel(%arg0: i32, %arg1: i32, %arg2: memref<1x32x256xf32, #tpu.memory_space<vmem>>, %arg3: memref<1x32x1xf32, #tpu.memory_space<vmem>>, %arg4: memref<1x32x1xf32, #tpu.memory_space<vmem>>, %arg5: memref<1x32x1xf32, #tpu.memory_space<vmem>>) attributes {dimension_semantics = [#tpu.dimension_semantics<parallel>, #tpu.dimension_semantics<arbitrary>], iteration_bounds = array<i64: 2, 1>, scalar_prefetch = 0 : i64, scratch_operands = 2 : i64, tpu.core_type = #tpu.core_type<tc>, window_params = [{transform_indices = @transform_0, window_bounds = array<i64: 1, 32, 256>}, {transform_indices = @transform_1, window_bounds = array<i64: 1, 32, 1>}]} {
    %c0 = arith.constant 0 : index
    %c0_0 = arith.constant 0 : index
    %c0_1 = arith.constant 0 : index
    %0 = vector.load %arg2[%c0, %c0_0, %c0_1] : memref<1x32x256xf32, #tpu.memory_space<vmem>>, vector<1x32x256xf32>
    %c0_i32 = arith.constant 0 : i32
    %1 = arith.cmpi eq, %arg1, %c0_i32 : i32
    %2 = arith.extui %1 : i1 to i32
    %c0_i32_2 = arith.constant 0 : i32
    %3 = arith.cmpi ne, %2, %c0_i32_2 : i32
    scf.if %3 {
      %cst_18 = arith.constant 0.000000e+00 : f32
      %17 = vector.broadcast %cst_18 : f32 to vector<1x32x1xf32>
      %c0_19 = arith.constant 0 : index
      %c0_20 = arith.constant 0 : index
      %c0_21 = arith.constant 0 : index
      %18 = vector.load %arg4[%c0_19, %c0_20, %c0_21] : memref<1x32x1xf32, #tpu.memory_space<vmem>>, vector<1x32x1xf32>
      tpu.vector_store %arg4[%c0_19, %c0_20, %c0_21], %17 {strides = array<i32>} : memref<1x32x1xf32, #tpu.memory_space<vmem>>, vector<1x32x1xf32>,
      %cst_22 = arith.constant 0xFF800000 : f32
      %19 = vector.broadcast %cst_22 : f32 to vector<1x32x1xf32>
      %c0_23 = arith.constant 0 : index
      %c0_24 = arith.constant 0 : index
      %c0_25 = arith.constant 0 : index
      %20 = vector.load %arg5[%c0_23, %c0_24, %c0_25] : memref<1x32x1xf32, #tpu.memory_space<vmem>>, vector<1x32x1xf32>
      tpu.vector_store %arg5[%c0_23, %c0_24, %c0_25], %19 {strides = array<i32>} : memref<1x32x1xf32, #tpu.memory_space<vmem>>, vector<1x32x1xf32>,
    } else {
    }
    %c0_3 = arith.constant 0 : index
    %c0_4 = arith.constant 0 : index
    %c0_5 = arith.constant 0 : index
    %4 = vector.load %arg4[%c0_3, %c0_4, %c0_5] : memref<1x32x1xf32, #tpu.memory_space<vmem>>, vector<1x32x1xf32>
    %cst = arith.constant dense<0.000000e+00> : vector<1x32xf32>
    %5 = vector.multi_reduction <add>, %0, %cst [2] : vector<1x32x256xf32> to vector<1x32xf32>
    %6 = vector.shape_cast %5 : vector<1x32xf32> to vector<1x32x1xf32>
    %7 = arith.addf %4, %6 : vector<1x32x1xf32>
    %c0_6 = arith.constant 0 : index
    %c0_7 = arith.constant 0 : index
    %c0_8 = arith.constant 0 : index
    %8 = vector.load %arg4[%c0_6, %c0_7, %c0_8] : memref<1x32x1xf32, #tpu.memory_space<vmem>>, vector<1x32x1xf32>
    tpu.vector_store %arg4[%c0_6, %c0_7, %c0_8], %7 {strides = array<i32>} : memref<1x32x1xf32, #tpu.memory_space<vmem>>, vector<1x32x1xf32>,
    %c0_9 = arith.constant 0 : index
    %c0_10 = arith.constant 0 : index
    %c0_11 = arith.constant 0 : index
    %9 = vector.load %arg5[%c0_9, %c0_10, %c0_11] : memref<1x32x1xf32, #tpu.memory_space<vmem>>, vector<1x32x1xf32>
    %cst_12 = arith.constant dense<0xFF800000> : vector<1x32xf32>
    %10 = vector.multi_reduction <maximumf>, %0, %cst_12 [2] : vector<1x32x256xf32> to vector<1x32xf32>
    %11 = vector.shape_cast %10 : vector<1x32xf32> to vector<1x32x1xf32>
    %12 = arith.maximumf %9, %11 : vector<1x32x1xf32>
    %c0_13 = arith.constant 0 : index
    %c0_14 = arith.constant 0 : index
    %c0_15 = arith.constant 0 : index
    %13 = vector.load %arg5[%c0_13, %c0_14, %c0_15] : memref<1x32x1xf32, #tpu.memory_space<vmem>>, vector<1x32x1xf32>
    tpu.vector_store %arg5[%c0_13, %c0_14, %c0_15], %12 {strides = array<i32>} : memref<1x32x1xf32, #tpu.memory_space<vmem>>, vector<1x32x1xf32>,
    %c0_i32_16 = arith.constant 0 : i32
    %14 = arith.cmpi eq, %arg1, %c0_i32_16 : i32
    %15 = arith.extui %14 : i1 to i32
    %c0_i32_17 = arith.constant 0 : i32
    %16 = arith.cmpi ne, %15, %c0_i32_17 : i32
    scf.if %16 {
      %c0_18 = arith.constant 0 : index
      %c0_19 = arith.constant 0 : index
      %c0_20 = arith.constant 0 : index
      %17 = vector.load %arg4[%c0_18, %c0_19, %c0_20] : memref<1x32x1xf32, #tpu.memory_space<vmem>>, vector<1x32x1xf32>
      %cst_21 = arith.constant 3.906250e-03 : f32
      %18 = vector.broadcast %cst_21 : f32 to vector<1x32x1xf32>
      %19 = arith.mulf %17, %18 : vector<1x32x1xf32>
      %c0_22 = arith.constant 0 : index
      %c0_23 = arith.constant 0 : index
      %c0_24 = arith.constant 0 : index
      %20 = vector.load %arg5[%c0_22, %c0_23, %c0_24] : memref<1x32x1xf32, #tpu.memory_space<vmem>>, vector<1x32x1xf32>
      %21 = arith.addf %19, %20 : vector<1x32x1xf32>
      %c0_25 = arith.constant 0 : index
      %c0_26 = arith.constant 0 : index
      %c0_27 = arith.constant 0 : index
      %22 = vector.load %arg3[%c0_25, %c0_26, %c0_27] : memref<1x32x1xf32, #tpu.memory_space<vmem>>, vector<1x32x1xf32>
      tpu.vector_store %arg3[%c0_25, %c0_26, %c0_27], %21 {strides = array<i32>} : memref<1x32x1xf32, #tpu.memory_space<vmem>>, vector<1x32x1xf32>,
    } else {
    }
    return
  }
  func.func @transform_0(%arg0: i32, %arg1: i32) -> (i32, i32, i32) {
    %c0_i32 = arith.constant 0 : i32
    %c0_i32_0 = arith.constant 0 : i32
    return %arg0, %c0_i32, %arg1 : i32, i32, i32
  }
  func.func @transform_1(%arg0: i32, %arg1: i32) -> (i32, i32, i32) {
    %c0_i32 = arith.constant 0 : i32
    %c0_i32_0 = arith.constant 0 : i32
    %c0_i32_1 = arith.constant 0 : i32
    return %arg0, %c0_i32, %c0_i32_0 : i32, i32, i32
  }
}

module attributes {stable_mosaic.version = 11 : i64} {
  func.func @_scale_kernel(%arg0: i32, %arg1: i32, %arg2: memref<1x32x256xf32, #tpu.memory_space<vmem>>, %arg3: memref<1x32x1xf32, #tpu.memory_space<vmem>>, %arg4: memref<1x32x256xf32, #tpu.memory_space<vmem>>) attributes {dimension_semantics = [#tpu.dimension_semantics<parallel>, #tpu.dimension_semantics<parallel>], iteration_bounds = array<i64: 2, 1>, scalar_prefetch = 0 : i64, scratch_operands = 0 : i64, tpu.core_type = #tpu.core_type<tc>, window_params = [{transform_indices = @transform_0, window_bounds = array<i64: 1, 32, 256>}, {transform_indices = @transform_1, window_bounds = array<i64: 1, 32, 1>}, {transform_indices = @transform_2, window_bounds = array<i64: 1, 32, 256>}]} {
    %c0 = arith.constant 0 : index
    %c0_0 = arith.constant 0 : index
    %c0_1 = arith.constant 0 : index
    %0 = vector.load %arg2[%c0, %c0_0, %c0_1] : memref<1x32x256xf32, #tpu.memory_space<vmem>>, vector<1x32x256xf32>
    %c0_2 = arith.constant 0 : index
    %c0_3 = arith.constant 0 : index
    %c0_4 = arith.constant 0 : index
    %1 = vector.load %arg3[%c0_2, %c0_3, %c0_4] : memref<1x32x1xf32, #tpu.memory_space<vmem>>, vector<1x32x1xf32>
    %2 = vector.broadcast %1 : vector<1x32x1xf32> to vector<1x32x256xf32>
    %3 = arith.mulf %0, %2 : vector<1x32x256xf32>
    %c0_5 = arith.constant 0 : index
    %c0_6 = arith.constant 0 : index
    %c0_7 = arith.constant 0 : index
    %4 = vector.load %arg4[%c0_5, %c0_6, %c0_7] : memref<1x32x256xf32, #tpu.memory_space<vmem>>, vector<1x32x256xf32>
    tpu.vector_store %arg4[%c0_5, %c0_6, %c0_7], %3 {strides = array<i32>} : memref<1x32x256xf32, #tpu.memory_space<vmem>>, vector<1x32x256xf32>,
    return
  }
  func.func @transform_0(%arg0: i32, %arg1: i32) -> (i32, i32, i32) {
    %c0_i32 = arith.constant 0 : i32
    %c0_i32_0 = arith.constant 0 : i32
    return %arg0, %c0_i32, %arg1 : i32, i32, i32
  }
  func.func @transform_1(%arg0: i32, %arg1: i32) -> (i32, i32, i32) {
    %c0_i32 = arith.constant 0 : i32
    %c0_i32_0 = arith.constant 0 : i32
    %c0_i32_1 = arith.constant 0 : i32
    return %arg0, %c0_i32, %c0_i32_0 : i32, i32, i32
  }
  func.func @transform_2(%arg0: i32, %arg1: i32) -> (i32, i32, i32) {
    %c0_i32 = arith.constant 0 : i32
    %c0_i32_0 = arith.constant 0 : i32
    return %arg0, %c0_i32, %arg1 : i32, i32, i32
  }
}

</mosaic_0001>

<llo_original>
// kernel: se_block.3
$region0: #{se_block.3}
  #allocation0 [shape = 'u32[]', space=smem, size = 0x4, offset = 0x4, fixed_abs, tag = 'smem constant byte address 0x4 - core index']
  #allocation1 [shape = 'u32[72,128]{1,0:T(1,128)}', space=vmem, size = 0x9000, scoped, tag = 'internal scratch']
  #allocation2 [shape = 'f32[1,32,1]{2,1,0:T(8,128)}', space=vmem, size = 0x4000, scoped, tag = 'scratch operand']
  #allocation3 [shape = 'f32[1,32,1]{2,1,0:T(8,128)}', space=vmem, size = 0x4000, scoped, tag = 'scratch operand']
  %s0 = inlined_call_operand.vmem [shape: f32[2,32,256], index: 0, kind: input, shape index: {}]
  %s1 = inlined_call_operand.vmem [shape: f32[2,32,1], index: 1, kind: output, shape index: {}]
  %s2 = sld [smem:[#allocation0]]
  $region45: #{se_block.3} parent=0
    _
  %s4 = ssub.s32 1, %s2
  %s5 = scalar_select 0, %s4, %s2
  loop: start=0, step=1, limit=4
  $region2: #{se_block.3} parent=0 // loop_pre_header
    _
  $region3: #{se_block.3} parent=0 // loop_header
    %s7 = sphi 0, %s11
    %p8 = scmp.ge.s32.totalorder %s7, 4
    %s14 = sphi 0, %s26
    %s15 = sphi 0, %s22
    %s16 = sphi 0, %s14
    %s17 = sphi 0, %s15
    %s18 = sphi 0, %s16
    %s19 = sphi 0, %s17
    %s31 = sphi 0, %s33
    %s34 = sphi 0, %s31
    %s35 = sphi 0, %s34
    %s51 = sphi 0, %s35
    %s57 = sphi 0, %s59
    %s60 = sphi 0, %s57
    %s61 = sphi 0, %s60
    %s77 = sphi 0, %s61
  $region4: #{se_block.3} parent=0 // loop_header_branch
    %10 = sbr.rel (%p8) target = $region8
  $region5: #{se_block.3} parent=0 // loop_body
    %s12 = ssub.s32 %s7, 1
    %s13 = ssub.s32 %s7, 2
    %s20 = sadd.s32 1, %s15
    %p21 = scmp.ge.s32.totalorder %s20, 1
    %s22 = scalar_select %p21, 0, %s20
    %s23 = sadd.s32 1, %s14
    %s24 = scalar_select %p21, %s23, %s14
    %p25 = scmp.ge.s32.totalorder %s24, 2
    %s26 = scalar_select %p25, 0, %s24
    %s27 = ssub.s32 %s14, %s26
    %s28 = ssub.s32 %s15, %s22
    %s29 = sor.u32 %s27, %s28
    %p30 = scmp.eq.s32.totalorder %s29, 0
    %s32 = sadd.s32 %s31, 1
    %s33 = scalar_select %p30, %s31, %s32
    %p36 = pneg %p30
    %p37 = scmp.eq.s32.totalorder %s7, 1
    %p38 = por %p36, %p37
    %p39 = scmp.ne.s32.totalorder %s31, %s34
    %p40 = scmp.eq.s32.totalorder %s7, 0
    %p41 = por %p39, %p40
    %p42 = scmp.ne.s32.totalorder %s31, %s34
    %p43 = scmp.eq.s32.totalorder %s12, 1
    %p44 = por %p42, %p43
    %p45 = scmp.ne.s32.totalorder %s34, %s35
    %p46 = scmp.eq.s32.totalorder %s12, 0
    %p47 = por %p45, %p46
    %p48 = scmp.ne.s32.totalorder %s34, %s35
    %p49 = scmp.eq.s32.totalorder %s13, 1
    %p50 = por %p48, %p49
    %p52 = scmp.ne.s32.totalorder %s35, %s51
    %p53 = scmp.eq.s32.totalorder %s13, 0
    %p54 = por %p52, %p53
    %s55 = ssub.s32 %s14, %s26
    %p56 = scmp.eq.s32.totalorder %s55, 0
    %s58 = sadd.s32 %s57, 1
    %s59 = scalar_select %p56, %s57, %s58
    %p62 = pneg %p56
    %p63 = scmp.eq.s32.totalorder %s7, 1
    %p64 = por %p62, %p63
    %p65 = scmp.ne.s32.totalorder %s57, %s60
    %p66 = scmp.eq.s32.totalorder %s7, 0
    %p67 = por %p65, %p66
    %p68 = scmp.ne.s32.totalorder %s57, %s60
    %p69 = scmp.eq.s32.totalorder %s12, 1
    %p70 = por %p68, %p69
    %p71 = scmp.ne.s32.totalorder %s60, %s61
    %p72 = scmp.eq.s32.totalorder %s12, 0
    %p73 = por %p71, %p72
    %p74 = scmp.ne.s32.totalorder %s60, %s61
    %p75 = scmp.eq.s32.totalorder %s13, 1
    %p76 = por %p74, %p75
    %p78 = scmp.ne.s32.totalorder %s61, %s77
    %p79 = scmp.eq.s32.totalorder %s13, 0
    %p80 = por %p78, %p79
    %p81 = scmp.le.s32.totalorder 1, %s7
    %p82 = scmp.lt.s32.totalorder %s7, 3
    %p83 = pnand %p81, %p82
    %p84 = pneg %p83
    // Predicated region
    $region9: #{se_block.3} parent=5 // pred_check
      _
    $region10: #{se_block.3} parent=5 // pred_check_branch
      %86 = sbr.rel (%p83) target = $region12
    $region11: #{se_block.3} parent=5 // pred_region
      %s87 = ssub.s32 %s7, 1
    $region12: #{se_block.3} parent=5 // pred_fallthru
      _
    %p88 = scmp.lt.s32.totalorder %s7, 2
    // Predicated region
    $region13: #{se_block.3} parent=5 // pred_check
      %p89 = pneg %p88
    $region14: #{se_block.3} parent=5 // pred_check_branch
      %91 = sbr.rel (%p89) target = $region16
    $region15: #{se_block.3} parent=5 // pred_region
      // Predicated region
      $region17: #{se_block.3} parent=15 // pred_check
        %p92 = pneg %p41
      $region18: #{se_block.3} parent=15 // pred_check_branch
        %94 = sbr.rel (%p92) target = $region20
      $region19: #{se_block.3} parent=15 // pred_region
        %s95 = smul.u32 2, %s15
        %p96 = scmp.lt.s32.totalorder %s14, 1
        %s97 = scalar_select %p96, %s14, 1
        %p98 = scmp.lt.s32.totalorder %s95, 1
        %s99 = scalar_select %p98, %s95, 1
        %s100 = smul.addr %s97, 8
        %s101 = sadd.s32 %s99, %s100
        %s102 = smul.addr %s101, 8
        %s103 = scalar_lea.vmem %s0, %s102
        %s104 = smul.u32 2, %s15
      $region20: #{se_block.3} parent=15 // pred_fallthru
        _
    $region16: #{se_block.3} parent=5 // pred_fallthru
      _
    %p105 = scmp.le.s32.totalorder 1, %s7
    %p106 = scmp.lt.s32.totalorder %s7, 3
    %p107 = pnand %p105, %p106
    %p108 = pneg %p107
    // Predicated region
    $region21: #{se_block.3} parent=5 // pred_check
      _
    $region22: #{se_block.3} parent=5 // pred_check_branch
      %110 = sbr.rel (%p107) target = $region24
    $region23: #{se_block.3} parent=5 // pred_region
      %s111 = ssub.s32 %s7, 1
      %s112 = smul.u32 2, %s17
      %p113 = scmp.lt.s32.totalorder %s16, 1
      %s114 = scalar_select %p113, %s16, 1
      %p115 = scmp.lt.s32.totalorder %s112, 1
      %s116 = scalar_select %p115, %s112, 1
      %s117 = smul.addr %s114, 8
      %s118 = sadd.s32 %s116, %s117
      %s119 = smul.addr %s118, 8
      %s120 = scalar_lea.vmem %s0, %s119
      %p121 = pneg %p47
      %p122 = pneg %p44
      %p123 = pneg %p73
      %p124 = pneg %p70
      %p125 = scmp.lt.s32.totalorder %s16, 1
      %s126 = scalar_select %p125, %s16, 1
      %s127 = smul.addr %s126, 4
      %s128 = smul.addr %s127, 8
      %s129 = scalar_lea.vmem %s1, %s128
      %s130 = smul.u32 2, %s17
      %p131 = scmp.lt.s32.totalorder %s16, 1
      %s132 = scalar_select %p131, %s16, 1
      %p133 = scmp.lt.s32.totalorder %s130, 1
      %s134 = scalar_select %p133, %s130, 1
      %s135 = smul.addr %s132, 8
      %s136 = sadd.s32 %s134, %s135
      %s137 = smul.addr %s136, 8
      %s138 = scalar_lea.vmem %s0, %s137
      %s139 = smul.u32 2, %s17
      %p140 = scmp.lt.s32.totalorder %s16, 1
      %s141 = scalar_select %p140, %s16, 1
      %s142 = smul.addr %s141, 4
      %s143 = smul.addr %s142, 8
      %s144 = scalar_lea.vmem %s1, %s143
      %v145 = vld [vmem:[%s138] sm:$0xff]
      %v146 = vld [vmem:[%s138 + $0x8] sm:$0xff]
      %v147 = vld [vmem:[%s138 + $0x10] sm:$0xff]
      %v148 = vld [vmem:[%s138 + $0x18] sm:$0xff]
      %v149 = vld [vmem:[%s138 + $0x20] sm:$0xff]
      %v150 = vld [vmem:[%s138 + $0x28] sm:$0xff]
      %v151 = vld [vmem:[%s138 + $0x30] sm:$0xff]
      %v152 = vld [vmem:[%s138 + $0x38] sm:$0xff]
      %p153 = scmp.eq.s32.totalorder %s17, 0
      // Predicated region
      $region25: #{se_block.3} parent=23 // pred_check
        %p154 = pneg %p153
      $region26: #{se_block.3} parent=23 // pred_check_branch
        %156 = sbr.rel (%p154) target = $region28
      $region27: #{se_block.3} parent=23 // pred_region
        %vm157 = vcmask 7168
        %158 = vst.msk [vmem:[#allocation2] sm:$0xff] %vm157, 0.0
        %159 = vst.msk [vmem:[#allocation2 + $0x8] sm:$0xff] %vm157, 0.0
        %160 = vst.msk [vmem:[#allocation2 + $0x10] sm:$0xff] %vm157, 0.0
        %161 = vst.msk [vmem:[#allocation2 + $0x18] sm:$0xff] %vm157, 0.0
        %162 = vst.msk [vmem:[#allocation3] sm:$0xff] %vm157, -inf
        %163 = vst.msk [vmem:[#allocation3 + $0x8] sm:$0xff] %vm157, -inf
        %164 = vst.msk [vmem:[#allocation3 + $0x10] sm:$0xff] %vm157, -inf
        %165 = vst.msk [vmem:[#allocation3 + $0x18] sm:$0xff] %vm157, -inf
      $region28: #{se_block.3} parent=23 // pred_fallthru
        _
      %v166 = vld [vmem:[#allocation2] sm:$0xff]
      %v167 = vld [vmem:[#allocation2 + $0x8] sm:$0xff]
      %v168 = vld [vmem:[#allocation2 + $0x10] sm:$0xff]
      %v169 = vld [vmem:[#allocation2 + $0x18] sm:$0xff]
      %v170 = vadd.f32 %v145, %v146
      %171 = vadd.xlane.f32.xlu0 %v170
      %v172 = vpop.xlane.xlu0 %171
      %v173 = vadd.f32 %v147, %v148
      %174 = vadd.xlane.f32.xlu0 %v173
      %v175 = vpop.xlane.xlu0 %174
      %v176 = vadd.f32 %v149, %v150
      %177 = vadd.xlane.f32.xlu0 %v176
      %v178 = vpop.xlane.xlu0 %177
      %v179 = vadd.f32 %v151, %v152
      %180 = vadd.xlane.f32.xlu0 %v179
      %v181 = vpop.xlane.xlu0 %180
      %v182 = vadd.f32 %v166, %v172
      %v183 = vadd.f32 %v167, %v175
      %v184 = vadd.f32 %v168, %v178
      %v185 = vadd.f32 %v169, %v181
      %vm186 = vcmask 7168
      %187 = vst.msk [vmem:[#allocation2] sm:$0xff] %vm186, %v182
      %188 = vst.msk [vmem:[#allocation2 + $0x8] sm:$0xff] %vm186, %v183
      %189 = vst.msk [vmem:[#allocation2 + $0x10] sm:$0xff] %vm186, %v184
      %190 = vst.msk [vmem:[#allocation2 + $0x18] sm:$0xff] %vm186, %v185
      %v191 = vld [vmem:[#allocation3] sm:$0xff]
      %v192 = vld [vmem:[#allocation3 + $0x8] sm:$0xff]
      %v193 = vld [vmem:[#allocation3 + $0x10] sm:$0xff]
      %v194 = vld [vmem:[#allocation3 + $0x18] sm:$0xff]
      %v195 = vmax.f32 %v145, %v146
      %196 = vmax.xlane.f32.xlu0 %v195
      %v197 = vpop.xlane.xlu0 %196
      %v198 = vmax.f32 %v147, %v148
      %199 = vmax.xlane.f32.xlu0 %v198
      %v200 = vpop.xlane.xlu0 %199
      %v201 = vmax.f32 %v149, %v150
      %202 = vmax.xlane.f32.xlu0 %v201
      %v203 = vpop.xlane.xlu0 %202
      %v204 = vmax.f32 %v151, %v152
      %205 = vmax.xlane.f32.xlu0 %v204
      %v206 = vpop.xlane.xlu0 %205
      %v207 = vmax.f32 %v191, %v197
      %v208 = vmax.f32 %v192, %v200
      %v209 = vmax.f32 %v193, %v203
      %v210 = vmax.f32 %v194, %v206
      %211 = vst.msk [vmem:[#allocation3] sm:$0xff] %vm186, %v207
      %212 = vst.msk [vmem:[#allocation3 + $0x8] sm:$0xff] %vm186, %v208
      %213 = vst.msk [vmem:[#allocation3 + $0x10] sm:$0xff] %vm186, %v209
      %214 = vst.msk [vmem:[#allocation3 + $0x18] sm:$0xff] %vm186, %v210
      // Predicated region
      $region29: #{se_block.3} parent=23 // pred_check
        %p215 = pneg %p153
      $region30: #{se_block.3} parent=23 // pred_check_branch
        %217 = sbr.rel (%p215) target = $region32
      $region31: #{se_block.3} parent=23 // pred_region
        %v218 = vld [vmem:[#allocation2] sm:$0xff]
        %v219 = vld [vmem:[#allocation2 + $0x8] sm:$0xff]
        %v220 = vld [vmem:[#allocation2 + $0x10] sm:$0xff]
        %v221 = vld [vmem:[#allocation2 + $0x18] sm:$0xff]
        %v222 = vmul.f32 %v218, 0.00390625
        %v223 = vmul.f32 %v219, 0.00390625
        %v224 = vmul.f32 %v220, 0.00390625
        %v225 = vmul.f32 %v221, 0.00390625
        %v226 = vld [vmem:[#allocation3] sm:$0xff]
        %v227 = vld [vmem:[#allocation3 + $0x8] sm:$0xff]
        %v228 = vld [vmem:[#allocation3 + $0x10] sm:$0xff]
        %v229 = vld [vmem:[#allocation3 + $0x18] sm:$0xff]
        %v230 = vadd.f32 %v222, %v226
        %v231 = vadd.f32 %v223, %v227
        %v232 = vadd.f32 %v224, %v228
        %v233 = vadd.f32 %v225, %v229
        %234 = vst.msk [vmem:[%s144] sm:$0xff] %vm186, %v230
        %235 = vst.msk [vmem:[%s144 + $0x8] sm:$0xff] %vm186, %v231
        %236 = vst.msk [vmem:[%s144 + $0x10] sm:$0xff] %vm186, %v232
        %237 = vst.msk [vmem:[%s144 + $0x18] sm:$0xff] %vm186, %v233
      $region32: #{se_block.3} parent=23 // pred_fallthru
        _
      %p238 = scmp.lt.s32.totalorder %s16, 1
      %s239 = scalar_select %p238, %s16, 1
      %s240 = smul.addr %s239, 4
      %s241 = smul.addr %s240, 8
      %s242 = scalar_lea.vmem %s1, %s241
      // Predicated region
      $region33: #{se_block.3} parent=23 // pred_check
        %p243 = pneg %p70
      $region34: #{se_block.3} parent=23 // pred_check_branch
        %245 = sbr.rel (%p243) target = $region36
      $region35: #{se_block.3} parent=23 // pred_region
        _
      $region36: #{se_block.3} parent=23 // pred_fallthru
        _
    $region24: #{se_block.3} parent=5 // pred_fallthru
      _
    %p246 = scmp.le.s32.totalorder 2, %s7
    // Predicated region
    $region37: #{se_block.3} parent=5 // pred_check
      %p247 = pneg %p246
    $region38: #{se_block.3} parent=5 // pred_check_branch
      %249 = sbr.rel (%p247) target = $region40
    $region39: #{se_block.3} parent=5 // pred_region
      %s250 = ssub.s32 %s7, 2
      // Predicated region
      $region41: #{se_block.3} parent=39 // pred_check
        %p251 = pneg %p76
      $region42: #{se_block.3} parent=39 // pred_check_branch
        %253 = sbr.rel (%p251) target = $region44
      $region43: #{se_block.3} parent=39 // pred_region
        %p254 = scmp.lt.s32.totalorder %s18, 1
        %s255 = scalar_select %p254, %s18, 1
        %s256 = smul.addr %s255, 4
        %s257 = smul.addr %s256, 8
        %s258 = scalar_lea.vmem %s1, %s257
      $region44: #{se_block.3} parent=39 // pred_fallthru
        _
    $region40: #{se_block.3} parent=5 // pred_fallthru
      _
  $region6: #{se_block.3} parent=0 // loop_footer
    %s11 = sadd.s32 1, %s7
  $region7: #{se_block.3} parent=0 // loop_footer_branch
    %6 = sbr.rel target = $region3
  $region8: #{se_block.3} parent=0 // loop_exit
    _

// kernel: se_block.4
$region0: #{se_block.4}
  #allocation0 [shape = 'u32[]', space=smem, size = 0x4, offset = 0x4, fixed_abs, tag = 'smem constant byte address 0x4 - core index']
  #allocation1 [shape = 'u32[72,128]{1,0:T(1,128)}', space=vmem, size = 0x9000, scoped, tag = 'internal scratch']
  #allocation2 [shape = 'f32[1]{0:T(128)S(6)}', space=smem, size = 0x200, scoped, tag = 'scoped memory for se_block.4']
  %s0 = inlined_call_operand.vmem [shape: f32[2,32], index: 0, kind: input, shape index: {}]
  %s1 = inlined_call_operand.vmem [shape: f32[32,2], index: 1, kind: input, shape index: {}]
  %s2 = inlined_call_operand.vmem [shape: f32[1,2], index: 2, kind: input, shape index: {}]
  %s3 = inlined_call_operand.<no memory space> [shape: f32[1], index: 3, kind: input, shape index: {}]
  %s4 = inlined_call_operand.vmem [shape: f32[2,32], index: 4, kind: input, shape index: {}]
  %s5 = inlined_call_operand.vmem [shape: f32[1,32], index: 5, kind: input, shape index: {}]
  %s6 = inlined_call_operand.vmem [shape: f32[2,32], index: 6, kind: output, shape index: {}]
  %s7 = sld [smem:[#allocation0]]
  $region34: #{se_block.4} parent=0
    _
  %s9 = ssub.s32 1, %s7
  %s10 = scalar_select 0, %s9, %s7
  %11 = sst [smem:[#allocation2]] %s3
  // Predicated region
  $region2: #{se_block.4} parent=0 // pred_check
    _
  $region3: #{se_block.4} parent=0 // pred_check_branch
    %13 = sbr.rel (0) target = $region5
  $region4: #{se_block.4} parent=0 // pred_region
    _
  $region5: #{se_block.4} parent=0 // pred_fallthru
    _
  // Predicated region
  $region6: #{se_block.4} parent=0 // pred_check
    _
  $region7: #{se_block.4} parent=0 // pred_check_branch
    %15 = sbr.rel (0) target = $region9
  $region8: #{se_block.4} parent=0 // pred_region
    _
  $region9: #{se_block.4} parent=0 // pred_fallthru
    _
  // Predicated region
  $region10: #{se_block.4} parent=0 // pred_check
    _
  $region11: #{se_block.4} parent=0 // pred_check_branch
    %17 = sbr.rel (0) target = $region13
  $region12: #{se_block.4} parent=0 // pred_region
    _
  $region13: #{se_block.4} parent=0 // pred_fallthru
    _
  // Predicated region
  $region14: #{se_block.4} parent=0 // pred_check
    _
  $region15: #{se_block.4} parent=0 // pred_check_branch
    %19 = sbr.rel (0) target = $region17
  $region16: #{se_block.4} parent=0 // pred_region
    _
  $region17: #{se_block.4} parent=0 // pred_fallthru
    _
  // Predicated region
  $region18: #{se_block.4} parent=0 // pred_check
    _
  $region19: #{se_block.4} parent=0 // pred_check_branch
    %21 = sbr.rel (0) target = $region21
  $region20: #{se_block.4} parent=0 // pred_region
    _
  $region21: #{se_block.4} parent=0 // pred_fallthru
    _
  // Predicated region
  $region22: #{se_block.4} parent=0 // pred_check
    _
  $region23: #{se_block.4} parent=0 // pred_check_branch
    %23 = sbr.rel (0) target = $region25
  $region24: #{se_block.4} parent=0 // pred_region
    _
  $region25: #{se_block.4} parent=0 // pred_fallthru
    _
  %v24 = vld [vmem:[%s0] sm:$0x3]
  %v25 = vld [vmem:[%s1] sm:$0xff]
  %v26 = vld [vmem:[%s1 + $0x8] sm:$0xff]
  %v27 = vld [vmem:[%s1 + $0x10] sm:$0xff]
  %v28 = vld [vmem:[%s1 + $0x18] sm:$0xff]
  %v29 = vld [vmem:[%s2] sm:$0x1]
  %v31 = vperm.slane %v29, 0
  %vm33 = vcmask 261120
  %v35 = vsel %vm33, %v24, 0
  %37 = vmatpush.msra.mxu0 0.0
  %38 = vmatpush.msra.mxu0 0.0
  %39 = vmatpush.msra.mxu0 0.0
  %40 = vmatpush.msra.mxu0 0.0
  %41 = vmatpush.msra.mxu0 0.0
  %42 = vmatpush.msra.mxu0 0.0
  %43 = vmatpush.msra.mxu0 0.0
  %44 = vmatpush.msra.mxu0 0.0
  %45 = vmatpush.msra.mxu0 0.0
  %46 = vmatpush.msra.mxu0 0.0
  %47 = vmatpush.msra.mxu0 0.0
  %48 = vmatpush.msra.mxu0 0.0
  %49 = vmatpush.msra.mxu0 %v28
  %50 = vmatpush.msra.mxu0 %v27
  %51 = vmatpush.msra.mxu0 %v26
  %52 = vmatpush.msra.mxu0 %v25
  %53 = vmatmul.f32.gmra.mxu0 %v35
  %v54 = vpop.f32.mrf.mxu0
  %v55 = vadd.f32 %v31, %v54
  %56 = vdwg.mxu0
  %s57 = sld [smem:[#allocation2]]
  %v58 = vmax.f32 %v55, 0.0
  %v59 = vmin.f32 %v55, 0.0
  %v60 = vstv %s57
  %v61 = vmul.f32 %v60, %v59
  %v62 = vadd.f32 %v58, %v61
  %v63 = vld [vmem:[%s4] sm:$0x3]
  %v64 = vld [vmem:[%s5] sm:$0x1]
  %v66 = vperm.slane %v64, 0
  %vm68 = vcmask 15360
  %v70 = vsel %vm68, %v62, 0
  %vm72 = vcmask 1041408
  %v74 = vsel %vm72, %v63, 0
  %76 = vmatpush.msra.mxu0 0.0
  %77 = vmatpush.msra.mxu0 0.0
  %78 = vmatpush.msra.mxu0 0.0
  %79 = vmatpush.msra.mxu0 0.0
  %80 = vmatpush.msra.mxu0 0.0
  %81 = vmatpush.msra.mxu0 0.0
  %82 = vmatpush.msra.mxu0 0.0
  %83 = vmatpush.msra.mxu0 0.0
  %84 = vmatpush.msra.mxu0 0.0
  %85 = vmatpush.msra.mxu0 0.0
  %86 = vmatpush.msra.mxu0 0.0
  %87 = vmatpush.msra.mxu0 0.0
  %88 = vmatpush.msra.mxu0 0.0
  %89 = vmatpush.msra.mxu0 0.0
  %90 = vmatpush.msra.mxu0 0.0
  %91 = vmatpush.msra.mxu0 %v74
  %92 = vmatmul.f32.gmra.mxu0 %v70
  %v93 = vpop.f32.mrf.mxu0
  %v94 = vadd.f32 %v66, %v93
  %95 = vdwg.mxu0
  %v96 = vxor.u32 %v94, 2147483648
  %v97 = vmul.f32 %v96, 1.442695
  %v98 = vpow.pop %v97
  %v99 = vadd.f32 %v98, 1.0
  %v100 = vrcp.pop %v99
  %v101 = vmul.f32 %v99, %v100
  %v102 = vsub.f32 1.0, %v101
  %v103 = vmul.f32 %v100, %v102
  %v104 = vadd.f32 %v100, %v103
  %vm105 = vweird.f32 %v99
  %vm106 = vweird.f32 %v100
  %vm107 = vmor %vm105, %vm106
  %v108 = vsel %vm107, %v100, %v104
  %v109 = vand.u32 2147483647, %v99
  %vm110 = vcmp.eq.f32.partialorder %v109, 8.507059e+37
  %v111 = vand.u32 %v99, 2147483648
  %v112 = vor.u32 1.1754944e-38, %v111
  %v113 = vsel %vm110, %v112, %v108
  %v114 = vmul.f32 1.0, %v113
  %vm115 = vcmask 254976
  %116 = vst.msk [vmem:[%s6] sm:$0x3] %vm115, %v114
  // Predicated region
  $region26: #{se_block.4} parent=0 // pred_check
    _
  $region27: #{se_block.4} parent=0 // pred_check_branch
    %118 = sbr.rel (0) target = $region29
  $region28: #{se_block.4} parent=0 // pred_region
    _
  $region29: #{se_block.4} parent=0 // pred_fallthru
    _
  // Predicated region
  $region30: #{se_block.4} parent=0 // pred_check
    _
  $region31: #{se_block.4} parent=0 // pred_check_branch
    %120 = sbr.rel (0) target = $region33
  $region32: #{se_block.4} parent=0 // pred_region
    _
  $region33: #{se_block.4} parent=0 // pred_fallthru
    _

// kernel: se_block.5
$region0: #{se_block.5}
  #allocation0 [shape = 'u32[]', space=smem, size = 0x4, offset = 0x4, fixed_abs, tag = 'smem constant byte address 0x4 - core index']
  #allocation1 [shape = 'u32[72,128]{1,0:T(1,128)}', space=vmem, size = 0x9000, scoped, tag = 'internal scratch']
  %s0 = inlined_call_operand.vmem [shape: f32[2,32,256], index: 0, kind: input, shape index: {}, may-alias: {0,2}]
  %s1 = inlined_call_operand.vmem [shape: f32[2,32,1], index: 1, kind: input, shape index: {}]
  %s2 = inlined_call_operand.vmem [shape: f32[2,32,256], index: 2, kind: output, shape index: {}, may-alias: {0,2}]
  %s3 = sld [smem:[#allocation0]]
  $region41: #{se_block.5} parent=0
    _
  %s5 = ssub.s32 1, %s3
  %s6 = scalar_select 0, %s5, %s3
  loop: start=0, step=1, limit=4
  $region2: #{se_block.5} parent=0 // loop_pre_header
    _
  $region3: #{se_block.5} parent=0 // loop_header
    %s8 = sphi 0, %s12
    %p9 = scmp.ge.s32.totalorder %s8, 4
    %s15 = sphi 0, %s27
    %s16 = sphi 0, %s23
    %s17 = sphi 0, %s15
    %s18 = sphi 0, %s16
    %s19 = sphi 0, %s17
    %s20 = sphi 0, %s18
    %s32 = sphi 0, %s34
    %s35 = sphi 0, %s32
    %s36 = sphi 0, %s35
    %s52 = sphi 0, %s36
    %s58 = sphi 0, %s60
    %s61 = sphi 0, %s58
    %s62 = sphi 0, %s61
    %s78 = sphi 0, %s62
    %s86 = sphi 0, %s88
    %s89 = sphi 0, %s86
    %s90 = sphi 0, %s89
    %s106 = sphi 0, %s90
  $region4: #{se_block.5} parent=0 // loop_header_branch
    %11 = sbr.rel (%p9) target = $region8
  $region5: #{se_block.5} parent=0 // loop_body
    %s13 = ssub.s32 %s8, 1
    %s14 = ssub.s32 %s8, 2
    %s21 = sadd.s32 1, %s16
    %p22 = scmp.ge.s32.totalorder %s21, 1
    %s23 = scalar_select %p22, 0, %s21
    %s24 = sadd.s32 1, %s15
    %s25 = scalar_select %p22, %s24, %s15
    %p26 = scmp.ge.s32.totalorder %s25, 2
    %s27 = scalar_select %p26, 0, %s25
    %s28 = ssub.s32 %s15, %s27
    %s29 = ssub.s32 %s16, %s23
    %s30 = sor.u32 %s28, %s29
    %p31 = scmp.eq.s32.totalorder %s30, 0
    %s33 = sadd.s32 %s32, 1
    %s34 = scalar_select %p31, %s32, %s33
    %p37 = pneg %p31
    %p38 = scmp.eq.s32.totalorder %s8, 1
    %p39 = por %p37, %p38
    %p40 = scmp.ne.s32.totalorder %s32, %s35
    %p41 = scmp.eq.s32.totalorder %s8, 0
    %p42 = por %p40, %p41
    %p43 = scmp.ne.s32.totalorder %s32, %s35
    %p44 = scmp.eq.s32.totalorder %s13, 1
    %p45 = por %p43, %p44
    %p46 = scmp.ne.s32.totalorder %s35, %s36
    %p47 = scmp.eq.s32.totalorder %s13, 0
    %p48 = por %p46, %p47
    %p49 = scmp.ne.s32.totalorder %s35, %s36
    %p50 = scmp.eq.s32.totalorder %s14, 1
    %p51 = por %p49, %p50
    %p53 = scmp.ne.s32.totalorder %s36, %s52
    %p54 = scmp.eq.s32.totalorder %s14, 0
    %p55 = por %p53, %p54
    %s56 = ssub.s32 %s15, %s27
    %p57 = scmp.eq.s32.totalorder %s56, 0
    %s59 = sadd.s32 %s58, 1
    %s60 = scalar_select %p57, %s58, %s59
    %p63 = pneg %p57
    %p64 = scmp.eq.s32.totalorder %s8, 1
    %p65 = por %p63, %p64
    %p66 = scmp.ne.s32.totalorder %s58, %s61
    %p67 = scmp.eq.s32.totalorder %s8, 0
    %p68 = por %p66, %p67
    %p69 = scmp.ne.s32.totalorder %s58, %s61
    %p70 = scmp.eq.s32.totalorder %s13, 1
    %p71 = por %p69, %p70
    %p72 = scmp.ne.s32.totalorder %s61, %s62
    %p73 = scmp.eq.s32.totalorder %s13, 0
    %p74 = por %p72, %p73
    %p75 = scmp.ne.s32.totalorder %s61, %s62
    %p76 = scmp.eq.s32.totalorder %s14, 1
    %p77 = por %p75, %p76
    %p79 = scmp.ne.s32.totalorder %s62, %s78
    %p80 = scmp.eq.s32.totalorder %s14, 0
    %p81 = por %p79, %p80
    %s82 = ssub.s32 %s15, %s27
    %s83 = ssub.s32 %s16, %s23
    %s84 = sor.u32 %s82, %s83
    %p85 = scmp.eq.s32.totalorder %s84, 0
    %s87 = sadd.s32 %s86, 1
    %s88 = scalar_select %p85, %s86, %s87
    %p91 = pneg %p85
    %p92 = scmp.eq.s32.totalorder %s8, 1
    %p93 = por %p91, %p92
    %p94 = scmp.ne.s32.totalorder %s86, %s89
    %p95 = scmp.eq.s32.totalorder %s8, 0
    %p96 = por %p94, %p95
    %p97 = scmp.ne.s32.totalorder %s86, %s89
    %p98 = scmp.eq.s32.totalorder %s13, 1
    %p99 = por %p97, %p98
    %p100 = scmp.ne.s32.totalorder %s89, %s90
    %p101 = scmp.eq.s32.totalorder %s13, 0
    %p102 = por %p100, %p101
    %p103 = scmp.ne.s32.totalorder %s89, %s90
    %p104 = scmp.eq.s32.totalorder %s14, 1
    %p105 = por %p103, %p104
    %p107 = scmp.ne.s32.totalorder %s90, %s106
    %p108 = scmp.eq.s32.totalorder %s14, 0
    %p109 = por %p107, %p108
    %p110 = scmp.le.s32.totalorder 1, %s8
    %p111 = scmp.lt.s32.totalorder %s8, 3
    %p112 = pnand %p110, %p111
    %p113 = pneg %p112
    // Predicated region
    $region9: #{se_block.5} parent=5 // pred_check
      _
    $region10: #{se_block.5} parent=5 // pred_check_branch
      %115 = sbr.rel (%p112) target = $region12
    $region11: #{se_block.5} parent=5 // pred_region
      %s116 = ssub.s32 %s8, 1
    $region12: #{se_block.5} parent=5 // pred_fallthru
      _
    %p117 = scmp.lt.s32.totalorder %s8, 2
    // Predicated region
    $region13: #{se_block.5} parent=5 // pred_check
      %p118 = pneg %p117
    $region14: #{se_block.5} parent=5 // pred_check_branch
      %120 = sbr.rel (%p118) target = $region16
    $region15: #{se_block.5} parent=5 // pred_region
      // Predicated region
      $region17: #{se_block.5} parent=15 // pred_check
        %p121 = pneg %p42
      $region18: #{se_block.5} parent=15 // pred_check_branch
        %123 = sbr.rel (%p121) target = $region20
      $region19: #{se_block.5} parent=15 // pred_region
        %s124 = smul.u32 2, %s16
        %p125 = scmp.lt.s32.totalorder %s15, 1
        %s126 = scalar_select %p125, %s15, 1
        %p127 = scmp.lt.s32.totalorder %s124, 1
        %s128 = scalar_select %p127, %s124, 1
        %s129 = smul.addr %s126, 8
        %s130 = sadd.s32 %s128, %s129
        %s131 = smul.addr %s130, 8
        %s132 = scalar_lea.vmem %s0, %s131
        %s133 = smul.u32 2, %s16
      $region20: #{se_block.5} parent=15 // pred_fallthru
        _
      // Predicated region
      $region21: #{se_block.5} parent=15 // pred_check
        %p134 = pneg %p68
      $region22: #{se_block.5} parent=15 // pred_check_branch
        %136 = sbr.rel (%p134) target = $region24
      $region23: #{se_block.5} parent=15 // pred_region
        %p137 = scmp.lt.s32.totalorder %s15, 1
        %s138 = scalar_select %p137, %s15, 1
        %s139 = smul.addr %s138, 4
        %s140 = smul.addr %s139, 8
        %s141 = scalar_lea.vmem %s1, %s140
      $region24: #{se_block.5} parent=15 // pred_fallthru
        _
    $region16: #{se_block.5} parent=5 // pred_fallthru
      _
    %p142 = scmp.le.s32.totalorder 1, %s8
    %p143 = scmp.lt.s32.totalorder %s8, 3
    %p144 = pnand %p142, %p143
    %p145 = pneg %p144
    // Predicated region
    $region25: #{se_block.5} parent=5 // pred_check
      _
    $region26: #{se_block.5} parent=5 // pred_check_branch
      %147 = sbr.rel (%p144) target = $region28
    $region27: #{se_block.5} parent=5 // pred_region
      %s148 = ssub.s32 %s8, 1
      %s149 = smul.u32 2, %s18
      %p150 = scmp.lt.s32.totalorder %s17, 1
      %s151 = scalar_select %p150, %s17, 1
      %p152 = scmp.lt.s32.totalorder %s149, 1
      %s153 = scalar_select %p152, %s149, 1
      %s154 = smul.addr %s151, 8
      %s155 = sadd.s32 %s153, %s154
      %s156 = smul.addr %s155, 8
      %s157 = scalar_lea.vmem %s0, %s156
      %p158 = pneg %p48
      %p159 = pneg %p45
      %p160 = scmp.lt.s32.totalorder %s17, 1
      %s161 = scalar_select %p160, %s17, 1
      %s162 = smul.addr %s161, 4
      %s163 = smul.addr %s162, 8
      %s164 = scalar_lea.vmem %s1, %s163
      %p165 = pneg %p74
      %p166 = pneg %p71
      %p167 = pneg %p102
      %p168 = pneg %p99
      %s169 = smul.u32 2, %s18
      %p170 = scmp.lt.s32.totalorder %s17, 1
      %s171 = scalar_select %p170, %s17, 1
      %p172 = scmp.lt.s32.totalorder %s169, 1
      %s173 = scalar_select %p172, %s169, 1
      %s174 = smul.addr %s171, 8
      %s175 = sadd.s32 %s173, %s174
      %s176 = smul.addr %s175, 8
      %s177 = scalar_lea.vmem %s2, %s176
      %s178 = smul.u32 2, %s18
      %p179 = scmp.lt.s32.totalorder %s17, 1
      %s180 = scalar_select %p179, %s17, 1
      %p181 = scmp.lt.s32.totalorder %s178, 1
      %s182 = scalar_select %p181, %s178, 1
      %s183 = smul.addr %s180, 8
      %s184 = sadd.s32 %s182, %s183
      %s185 = smul.addr %s184, 8
      %s186 = scalar_lea.vmem %s0, %s185
      %s187 = smul.u32 2, %s18
      %p188 = scmp.lt.s32.totalorder %s17, 1
      %s189 = scalar_select %p188, %s17, 1
      %s190 = smul.addr %s189, 4
      %s191 = smul.addr %s190, 8
      %s192 = scalar_lea.vmem %s1, %s191
      %s193 = smul.u32 2, %s18
      %p194 = scmp.lt.s32.totalorder %s17, 1
      %s195 = scalar_select %p194, %s17, 1
      %p196 = scmp.lt.s32.totalorder %s193, 1
      %s197 = scalar_select %p196, %s193, 1
      %s198 = smul.addr %s195, 8
      %s199 = sadd.s32 %s197, %s198
      %s200 = smul.addr %s199, 8
      %s201 = scalar_lea.vmem %s2, %s200
      %s202 = smul.u32 2, %s18
      %v203 = vld [vmem:[%s186] sm:$0xff]
      %v204 = vld [vmem:[%s186 + $0x8] sm:$0xff]
      %v205 = vld [vmem:[%s186 + $0x10] sm:$0xff]
      %v206 = vld [vmem:[%s186 + $0x18] sm:$0xff]
      %v207 = vld [vmem:[%s186 + $0x20] sm:$0xff]
      %v208 = vld [vmem:[%s186 + $0x28] sm:$0xff]
      %v209 = vld [vmem:[%s186 + $0x30] sm:$0xff]
      %v210 = vld [vmem:[%s186 + $0x38] sm:$0xff]
      %v211 = vld [vmem:[%s192] sm:$0xff]
      %v212 = vld [vmem:[%s192 + $0x8] sm:$0xff]
      %v213 = vld [vmem:[%s192 + $0x10] sm:$0xff]
      %v214 = vld [vmem:[%s192 + $0x18] sm:$0xff]
      %216 = vset.pattern.permute.xlu0 0
      %217 = vperm.xlu0 %216, %v211
      %v218 = vpop.permute.xlu0 %217
      %221 = vset.pattern.permute.xlu0 0
      %222 = vperm.xlu0 %221, %v212
      %v223 = vpop.permute.xlu0 %222
      %226 = vset.pattern.permute.xlu0 0
      %227 = vperm.xlu0 %226, %v213
      %v228 = vpop.permute.xlu0 %227
      %231 = vset.pattern.permute.xlu0 0
      %232 = vperm.xlu0 %231, %v214
      %v233 = vpop.permute.xlu0 %232
      %v235 = vmul.f32 %v203, %v218
      %v236 = vmul.f32 %v204, %v218
      %v237 = vmul.f32 %v205, %v223
      %v238 = vmul.f32 %v206, %v223
      %v239 = vmul.f32 %v207, %v228
      %v240 = vmul.f32 %v208, %v228
      %v241 = vmul.f32 %v209, %v233
      %v242 = vmul.f32 %v210, %v233
      %243 = vst [vmem:[%s201] sm:$0xff] %v235
      %244 = vst [vmem:[%s201 + $0x8] sm:$0xff] %v236
      %245 = vst [vmem:[%s201 + $0x10] sm:$0xff] %v237
      %246 = vst [vmem:[%s201 + $0x18] sm:$0xff] %v238
      %247 = vst [vmem:[%s201 + $0x20] sm:$0xff] %v239
      %248 = vst [vmem:[%s201 + $0x28] sm:$0xff] %v240
      %249 = vst [vmem:[%s201 + $0x30] sm:$0xff] %v241
      %250 = vst [vmem:[%s201 + $0x38] sm:$0xff] %v242
      %s251 = smul.u32 2, %s18
      %p252 = scmp.lt.s32.totalorder %s17, 1
      %s253 = scalar_select %p252, %s17, 1
      %p254 = scmp.lt.s32.totalorder %s251, 1
      %s255 = scalar_select %p254, %s251, 1
      %s256 = smul.addr %s253, 8
      %s257 = sadd.s32 %s255, %s256
      %s258 = smul.addr %s257, 8
      %s259 = scalar_lea.vmem %s2, %s258
      // Predicated region
      $region29: #{se_block.5} parent=27 // pred_check
        %p260 = pneg %p99
      $region30: #{se_block.5} parent=27 // pred_check_branch
        %262 = sbr.rel (%p260) target = $region32
      $region31: #{se_block.5} parent=27 // pred_region
        %s263 = smul.u32 2, %s18
      $region32: #{se_block.5} parent=27 // pred_fallthru
        _
    $region28: #{se_block.5} parent=5 // pred_fallthru
      _
    %p264 = scmp.le.s32.totalorder 2, %s8
    // Predicated region
    $region33: #{se_block.5} parent=5 // pred_check
      %p265 = pneg %p264
    $region34: #{se_block.5} parent=5 // pred_check_branch
      %267 = sbr.rel (%p265) target = $region36
    $region35: #{se_block.5} parent=5 // pred_region
      %s268 = ssub.s32 %s8, 2
      // Predicated region
      $region37: #{se_block.5} parent=35 // pred_check
        %p269 = pneg %p105
      $region38: #{se_block.5} parent=35 // pred_check_branch
        %271 = sbr.rel (%p269) target = $region40
      $region39: #{se_block.5} parent=35 // pred_region
        %s272 = smul.u32 2, %s20
        %p273 = scmp.lt.s32.totalorder %s19, 1
        %s274 = scalar_select %p273, %s19, 1
        %p275 = scmp.lt.s32.totalorder %s272, 1
        %s276 = scalar_select %p275, %s272, 1
        %s277 = smul.addr %s274, 8
        %s278 = sadd.s32 %s276, %s277
        %s279 = smul.addr %s278, 8
        %s280 = scalar_lea.vmem %s2, %s279
      $region40: #{se_block.5} parent=35 // pred_fallthru
        _
    $region36: #{se_block.5} parent=5 // pred_fallthru
      _
  $region6: #{se_block.5} parent=0 // loop_footer
    %s12 = sadd.s32 1, %s8
  $region7: #{se_block.5} parent=0 // loop_footer_branch
    %7 = sbr.rel target = $region3
  $region8: #{se_block.5} parent=0 // loop_exit
    _

</llo_original>
